<compile_context>
chip_gen: v6e
topology: v6e:2x2x1
jax: 0.10.0
libtpu: 0.0.40
codegen_flags: <defaults>
</compile_context>

<pallas_src>
import jax
import jax.numpy as jnp
from jax import lax
from jax.experimental import pallas as pl
from jax.experimental.pallas import tpu as pltpu


# --------------------------------------------------------------------------
# Generation-aware sizing helpers
# --------------------------------------------------------------------------
def _device_kind() -> str:
    try:
        return jax.devices()[0].device_kind.lower()
    except Exception:
        return ""


def _pick_tile_m(n: int, kind: str) -> int:
    """Largest aligned row tile that divides N (in-kernel slices never pad/OOB)."""
    # v6e / v7x MXUs are 2x256^2 -> prefer TM=256; v5e's is 4x128^2 -> TM=128.
    prefer = 256 if ("v6" in kind or "v7" in kind) else 128
    # v7x has two TensorCores sharing the ("parallel",) row axis: keep >= 2 row
    # tiles when possible so both cores get work.
    if "v7" in kind and n <= 2 * prefer:
        prefer = 128
    if n <= prefer:
        return n
    for t in range(prefer, 15, -16):      # multiple-of-16 (bf16 sublane packing)
        if n % t == 0:
            return t
    return n                               # no aligned divisor: one big row tile


def _pick_col_chunk(n: int) -> int:
    """Lane-aligned column chunk dividing N; bounds live (TM, chunk) temporaries."""
    if n <= 512:
        return n
    for c in (512, 384, 256, 128):
        if n % c == 0:
            return c
    return n


def _pick_vmem_limit(kind: str, n: int, d: int, feat_itemsize: int,
                     tile_m: int, col_chunk: int) -> int:
    # Resident inputs (features + both label layouts with (8,128) VMEM padding)
    # plus generous headroom for (TM, chunk) temporaries and compiler scratch.
    resident = n * d * feat_itemsize + n * 128 * 4 + 8 * n * 4
    work = tile_m * max(col_chunk, 128) * 4 * 8
    need = 2 * resident + work + (8 << 20)
    cap = (48 << 20) if "v7" in kind else (100 << 20)   # v7x: 64 MiB VMEM/core
    return int(min(cap, max(32 << 20, need)))


# --------------------------------------------------------------------------
# Kernel
# --------------------------------------------------------------------------
def _supcon_row_tile_kernel(inv_temp: float, tile_m: int, col_chunk: int,
                            num_chunks: int, num_tiles: int):
    """Per row-tile kernel: writes the sum of per-row (un-negated) losses."""

    def kernel(fn_ref, lab_row_ref, lab_col_ref, out_ref):
        i = pl.program_id(0)
        if num_tiles == 1:                      # static: whole-matrix fast path
            row0 = 0
        else:
            row0 = pl.multiple_of(i * tile_m, tile_m)

        q = fn_ref[pl.ds(row0, tile_m), :]            # (TM, D), MXU dtype
        lab_c = lab_col_ref[pl.ds(row0, tile_m), :]   # (TM, 1) int32

        # Row self-similarity from the same (cast) inputs, in f32. Rows are
        # unit-norm in f32 but after the bf16 cast ||q||^2 != 1 exactly, so the
        # algebraic diagonal removal subtracts this per-row value rather than
        # the constant 1/T. O(TM*D) VPU work; no (TM, N) iota/mask/select.
        qf = q.astype(jnp.float32)
        diag_logit = jnp.sum(qf * qf, axis=-1, keepdims=True) * inv_temp  # (TM,1)

        def col_block(c, carry):
            denom, pos_cnt, pos_sum = carry
            if num_chunks == 1:                 # static: straight-line path
                col0 = 0
            else:
                col0 = pl.multiple_of(c * col_chunk, col_chunk)
            k = fn_ref[pl.ds(col0, col_chunk), :]              # (TC, D)
            lab_r = lab_row_ref[:, pl.ds(col0, col_chunk)]     # (1, TC) int32
            # (TM, TC) similarity logits on the MXU; contract both operands on
            # D (no transposed copy of the K matrix), accumulate in f32.
            logits = lax.dot_general(
                q, k,
                dimension_numbers=(((1,), (1,)), ((), ())),
                preferred_element_type=jnp.float32,
            ) * inv_temp
            # Stable exp: rows are (near) unit norm, so logits <= ~1/T.
            exp_shift = jnp.exp(logits - inv_temp)
            eq = lab_c == lab_r                                # (TM, TC) bool
            denom = denom + jnp.sum(exp_shift, axis=-1, keepdims=True)
            pos_cnt = pos_cnt + jnp.sum(eq.astype(jnp.float32), axis=-1,
                                        keepdims=True)
            pos_sum = pos_sum + jnp.sum(jnp.where(eq, logits, 0.0), axis=-1,
                                        keepdims=True)
            return denom, pos_cnt, pos_sum

        zeros = jnp.zeros((tile_m, 1), jnp.float32)
        init = (zeros, zeros, zeros)
        if num_chunks == 1:
            denom, pos_cnt, pos_sum = col_block(0, init)
        else:
            denom, pos_cnt, pos_sum = lax.fori_loop(
                0, num_chunks, col_block, init, unroll=(num_chunks <= 8))

        # Remove the self-pair (diagonal) contribution from every row sum.
        denom = denom - jnp.exp(diag_logit - inv_temp)
        pos_cnt = pos_cnt - 1.0
        pos_sum = pos_sum - diag_logit

        log_denom = jnp.log(denom) + inv_temp                  # (TM, 1)
        # sum_j pos_ij * (logit_ij - log_denom_i) / (#positives_i). Rows with
        # zero positives give 0/0 = NaN, exactly like the PyTorch reference.
        per_row = (pos_sum - pos_cnt * log_denom) / pos_cnt
        out_ref[...] = jnp.sum(per_row).reshape(1, 1, 1)

    return kernel


# --------------------------------------------------------------------------
# Wrapper
# --------------------------------------------------------------------------
def supcon_loss(features, labels, temperature=0.07, *, tile_m=None,
                col_chunk=None, mxu_dtype=jnp.bfloat16):
    """features: [B, V, D] float, labels: [B] int -> scalar float32 loss.

    Mirrors SupConLoss.forward from the PyTorch reference.
    """
    B, V, D = features.shape
    N = B * V

    f = features.astype(jnp.float32)
    # F.normalize(dim=-1): x / max(||x||, eps) == x * rsqrt(max(||x||^2, eps^2)).
    sumsq = jnp.sum(f * f, axis=-1, keepdims=True)
    fn3 = f * lax.rsqrt(jnp.maximum(sumsq, 1e-24))
    # View-major flatten: row v*B + b == features[b, v] (torch.cat(torch.unbind)).
    fn = jnp.transpose(fn3, (1, 0, 2)).reshape(N, D)
    # Feed the MXU in bf16 (f32 accumulation inside the kernel); the
    # normalization above stays f32.
    fn = fn.astype(mxu_dtype)

    labels_rep = jnp.tile(labels.astype(jnp.int32), V)          # (N,)
    lab_row = labels_rep.reshape(1, N)                           # lane-dense row
    lab_col = labels_rep.reshape(N, 1)                           # column form

    kind = _device_kind()
    if tile_m is None:
        tile_m = _pick_tile_m(N, kind)
    if col_chunk is None:
        col_chunk = _pick_col_chunk(N)
    assert N % tile_m == 0, (N, tile_m)
    assert N % col_chunk == 0, (N, col_chunk)
    num_tiles = N // tile_m
    num_chunks = N // col_chunk
    inv_temp = 1.0 / float(temperature)
    vmem_limit = _pick_vmem_limit(kind, N, D, jnp.dtype(mxu_dtype).itemsize,
                                  tile_m, col_chunk)

    kernel = _supcon_row_tile_kernel(inv_temp, tile_m, col_chunk,
                                     num_chunks, num_tiles)

    def run(single_buffer):
        def resident_spec(shape):
            # Grid-invariant inputs (constant index_map): one buffer is enough.
            if single_buffer:
                return pl.BlockSpec(shape, lambda i: (0, 0),
                                    pipeline_mode=pl.Buffered(1))
            return pl.BlockSpec(shape, lambda i: (0, 0))

        return pl.pallas_call(
            kernel,
            out_shape=jax.ShapeDtypeStruct((num_tiles, 1, 1), jnp.float32),
            grid=(num_tiles,),
            in_specs=[
                resident_spec((N, D)),   # normalized features (resident)
                resident_spec((1, N)),   # labels, lane-dense row
                resident_spec((N, 1)),   # labels, column (sliced per row tile)
            ],
            out_specs=pl.BlockSpec((1, 1, 1), lambda i: (i, 0, 0)),
            compiler_params=pltpu.CompilerParams(
                dimension_semantics=("parallel",),   # row tiles shard across TCs
                vmem_limit_bytes=vmem_limit,
            ),
        )(fn, lab_row, lab_col)

    try:
        partials = run(single_buffer=True)
    except Exception:
        # pipeline_mode=pl.Buffered(1) unsupported on this jax/libtpu build:
        # fall back to the default double-buffered pipeline (correct, just a
        # little more VMEM for the resident inputs).
        partials = run(single_buffer=False)

    return -jnp.sum(partials) / N


# --------------------------------------------------------------------------
# Reference + self-test
# --------------------------------------------------------------------------
def _reference_supcon(features, labels, temperature=0.07):
    """Pure-JAX mirror of the PyTorch forward, for the correctness check."""
    B, V, D = features.shape
    N = B * V
    f = jnp.transpose(features.astype(jnp.float32), (1, 0, 2)).reshape(N, D)
    f = f / jnp.maximum(jnp.linalg.norm(f, axis=-1, keepdims=True), 1e-12)
    dist = jnp.matmul(f, f.T, precision=jax.lax.Precision.HIGHEST)
    exp_d = jnp.exp(dist / temperature)
    lab = jnp.tile(labels, V)
    eq = (lab[:, None] == lab[None, :]).astype(jnp.float32)
    eye = jnp.eye(N, dtype=jnp.float32)
    pos_mask = eq - eye
    all_mask = jnp.ones((N, N), jnp.float32) - eye
    denom = jnp.sum(exp_d * all_mask, axis=-1, keepdims=True)
    loss_all = jnp.log(exp_d / denom)
    loss = jnp.sum(loss_all * pos_mask, axis=-1) / jnp.sum(pos_mask, axis=-1)
    return -jnp.mean(loss)


def _make_clustered_inputs(key, B, V, D, n_classes):
    """Label-clustered features: each view = class prototype + noise.

    This is the regime a contrastive loss actually runs in (positives are
    similar) and keeps the softmax denominators well away from underflow,
    where the bf16 MXU feed is least accurate.
    """
    k_proto, k_noise, k_lab = jax.random.split(key, 3)
    labels = jax.random.randint(k_lab, (B,), 0, n_classes, dtype=jnp.int32)
    protos = jax.random.normal(k_proto, (n_classes, D), dtype=jnp.float32)
    noise = 0.3 * jax.random.normal(k_noise, (B, V, D), dtype=jnp.float32)
    features = protos[labels][:, None, :] + noise
    return features, labels


if __name__ == "__main__":
    key = jax.random.PRNGKey(0)

    # Primary small check: B=8 samples, V=2 views, D=32 embeddings (N=16).
    features, labels = _make_clustered_inputs(key, B=8, V=2, D=32, n_classes=4)
    loss = supcon_loss(features, labels, temperature=0.07)
    loss = jax.block_until_ready(loss)
    ref = _reference_supcon(features, labels, temperature=0.07)
    assert bool(jnp.isfinite(loss)), loss
    # bf16 MXU feed + algebraic diagonal removal: compare at a few-percent tol.
    assert jnp.allclose(loss, ref, rtol=5e-2, atol=5e-2), (loss, ref)

    # Secondary check exercising multiple row tiles and in-kernel column
    # chunking (still small: 256 x 32 normalized features).
    features2, labels2 = _make_clustered_inputs(
        jax.random.PRNGKey(0), B=128, V=2, D=32, n_classes=16)
    loss2 = supcon_loss(features2, labels2, temperature=0.07,
                        tile_m=128, col_chunk=128)
    loss2 = jax.block_until_ready(loss2)
    ref2 = _reference_supcon(features2, labels2, temperature=0.07)
    assert bool(jnp.isfinite(loss2)), loss2
    assert jnp.allclose(loss2, ref2, rtol=5e-2, atol=5e-2), (loss2, ref2)

    print("KERNEL_OK")
</pallas_src>

<mosaic_0001>
module attributes {stable_mosaic.version = 11 : i64} {
  func.func @kernel(%arg0: i32, %arg1: memref<16x32xbf16, #tpu.memory_space<vmem>>, %arg2: memref<1x16xi32, #tpu.memory_space<vmem>>, %arg3: memref<16x1xi32, #tpu.memory_space<vmem>>, %arg4: memref<1x1x1xf32, #tpu.memory_space<vmem>>) attributes {dimension_semantics = [#tpu.dimension_semantics<parallel>], iteration_bounds = array<i64: 1>, scalar_prefetch = 0 : i64, scratch_operands = 0 : i64, tpu.core_type = #tpu.core_type<tc>, window_params = [{pipeline_mode = #tpu.pipeline_mode<synchronous>, transform_indices = @transform_0, window_bounds = array<i64: 16, 32>}, {pipeline_mode = #tpu.pipeline_mode<synchronous>, transform_indices = @transform_1, window_bounds = array<i64: 1, 16>}, {pipeline_mode = #tpu.pipeline_mode<synchronous>, transform_indices = @transform_2, window_bounds = array<i64: 16, 1>}, {transform_indices = @transform_3, window_bounds = array<i64: 1, 1, 1>}]} {
    %c0 = arith.constant 0 : index
    %c0_0 = arith.constant 0 : index
    %0 = vector.load %arg1[%c0, %c0_0] : memref<16x32xbf16, #tpu.memory_space<vmem>>, vector<16x32xbf16>
    %c0_1 = arith.constant 0 : index
    %c0_2 = arith.constant 0 : index
    %1 = vector.load %arg3[%c0_1, %c0_2] : memref<16x1xi32, #tpu.memory_space<vmem>>, vector<16x1xi32>
    %2 = arith.extf %0 : vector<16x32xbf16> to vector<16x32xf32>
    %3 = arith.mulf %2, %2 : vector<16x32xf32>
    %cst = arith.constant dense<0.000000e+00> : vector<16xf32>
    %4 = vector.multi_reduction <add>, %3, %cst [1] : vector<16x32xf32> to vector<16xf32>
    %5 = vector.shape_cast %4 : vector<16xf32> to vector<16x1xf32>
    %cst_3 = arith.constant 14.2857141 : f32
    %6 = vector.broadcast %cst_3 : f32 to vector<16x1xf32>
    %7 = arith.mulf %5, %6 : vector<16x1xf32>
    %cst_4 = arith.constant 0.000000e+00 : f32
    %8 = vector.broadcast %cst_4 : f32 to vector<16x1xf32>
    %c0_5 = arith.constant 0 : index
    %c0_6 = arith.constant 0 : index
    %9 = vector.load %arg1[%c0_5, %c0_6] : memref<16x32xbf16, #tpu.memory_space<vmem>>, vector<16x32xbf16>
    %c0_7 = arith.constant 0 : index
    %c0_8 = arith.constant 0 : index
    %10 = vector.load %arg2[%c0_7, %c0_8] : memref<1x16xi32, #tpu.memory_space<vmem>>, vector<1x16xi32>
    %cst_9 = arith.constant dense<0.000000e+00> : vector<16x16xf32>
    %11 = tpu.matmul %0, %9, %cst_9 {dimension_numbers = #tpu.dot_dimension_numbers<[1], [1], [0], [0], [0, 0, 1, 0], [], []>} : vector<16x32xbf16>, vector<16x32xbf16>, vector<16x16xf32> -> vector<16x16xf32>
    %cst_10 = arith.constant 14.2857141 : f32
    %12 = vector.broadcast %cst_10 : f32 to vector<16x16xf32>
    %13 = arith.mulf %11, %12 : vector<16x16xf32>
    %cst_11 = arith.constant 14.2857141 : f32
    %14 = vector.broadcast %cst_11 : f32 to vector<16x16xf32>
    %15 = arith.subf %13, %14 : vector<16x16xf32>
    %16 = math.exp %15 : vector<16x16xf32>
    %17 = vector.broadcast %1 : vector<16x1xi32> to vector<16x16xi32>
    %18 = vector.broadcast %10 : vector<1x16xi32> to vector<16x16xi32>
    %19 = arith.cmpi eq, %17, %18 : vector<16x16xi32>
    %cst_12 = arith.constant dense<0.000000e+00> : vector<16xf32>
    %20 = vector.multi_reduction <add>, %16, %cst_12 [1] : vector<16x16xf32> to vector<16xf32>
    %21 = vector.shape_cast %20 : vector<16xf32> to vector<16x1xf32>
    %22 = arith.addf %8, %21 : vector<16x1xf32>
    %23 = arith.extui %19 : vector<16x16xi1> to vector<16x16xi32>
    %24 = arith.sitofp %23 : vector<16x16xi32> to vector<16x16xf32>
    %cst_13 = arith.constant dense<0.000000e+00> : vector<16xf32>
    %25 = vector.multi_reduction <add>, %24, %cst_13 [1] : vector<16x16xf32> to vector<16xf32>
    %26 = vector.shape_cast %25 : vector<16xf32> to vector<16x1xf32>
    %27 = arith.addf %8, %26 : vector<16x1xf32>
    %cst_14 = arith.constant 0.000000e+00 : f32
    %28 = vector.broadcast %cst_14 : f32 to vector<16x16xf32>
    %29 = arith.select %19, %13, %28 : vector<16x16xi1>, vector<16x16xf32>
    %cst_15 = arith.constant dense<0.000000e+00> : vector<16xf32>
    %30 = vector.multi_reduction <add>, %29, %cst_15 [1] : vector<16x16xf32> to vector<16xf32>
    %31 = vector.shape_cast %30 : vector<16xf32> to vector<16x1xf32>
    %32 = arith.addf %8, %31 : vector<16x1xf32>
    %cst_16 = arith.constant 14.2857141 : f32
    %33 = vector.broadcast %cst_16 : f32 to vector<16x1xf32>
    %34 = arith.subf %7, %33 : vector<16x1xf32>
    %35 = math.exp %34 : vector<16x1xf32>
    %36 = arith.subf %22, %35 : vector<16x1xf32>
    %cst_17 = arith.constant 1.000000e+00 : f32
    %37 = vector.broadcast %cst_17 : f32 to vector<16x1xf32>
    %38 = arith.subf %27, %37 : vector<16x1xf32>
    %39 = arith.subf %32, %7 : vector<16x1xf32>
    %40 = math.log %36 : vector<16x1xf32>
    %cst_18 = arith.constant 14.2857141 : f32
    %41 = vector.broadcast %cst_18 : f32 to vector<16x1xf32>
    %42 = arith.addf %40, %41 : vector<16x1xf32>
    %43 = arith.mulf %38, %42 : vector<16x1xf32>
    %44 = arith.subf %39, %43 : vector<16x1xf32>
    %45 = arith.divf %44, %38 : vector<16x1xf32>
    %46 = vector.shape_cast %45 : vector<16x1xf32> to vector<1x16x1xf32>
    %cst_19 = arith.constant dense<0.000000e+00> : vector<1xf32>
    %47 = vector.multi_reduction <add>, %46, %cst_19 [1, 2] : vector<1x16x1xf32> to vector<1xf32>
    %48 = vector.shape_cast %47 : vector<1xf32> to vector<1x1x1xf32>
    %49 = vector.extract %48[0, 0, 0] : f32 from vector<1x1x1xf32>
    %50 = vector.broadcast %49 : f32 to vector<1x1x1xf32>
    %c0_20 = arith.constant 0 : index
    %c0_21 = arith.constant 0 : index
    %c0_22 = arith.constant 0 : index
    %51 = vector.load %arg4[%c0_20, %c0_21, %c0_22] : memref<1x1x1xf32, #tpu.memory_space<vmem>>, vector<1x1x1xf32>
    tpu.vector_store %arg4[%c0_20, %c0_21, %c0_22], %50 {strides = array<i32>} : memref<1x1x1xf32, #tpu.memory_space<vmem>>, vector<1x1x1xf32>,
    return
  }
  func.func @transform_0(%arg0: i32) -> (i32, i32) {
    %c0_i32 = arith.constant 0 : i32
    %c0_i32_0 = arith.constant 0 : i32
    %c0_i32_1 = arith.constant 0 : i32
    return %c0_i32, %c0_i32_0 : i32, i32
  }
  func.func @transform_1(%arg0: i32) -> (i32, i32) {
    %c0_i32 = arith.constant 0 : i32
    %c0_i32_0 = arith.constant 0 : i32
    %c0_i32_1 = arith.constant 0 : i32
    return %c0_i32, %c0_i32_0 : i32, i32
  }
  func.func @transform_2(%arg0: i32) -> (i32, i32) {
    %c0_i32 = arith.constant 0 : i32
    %c0_i32_0 = arith.constant 0 : i32
    %c0_i32_1 = arith.constant 0 : i32
    return %c0_i32, %c0_i32_0 : i32, i32
  }
  func.func @transform_3(%arg0: i32) -> (i32, i32, i32) {
    %c0_i32 = arith.constant 0 : i32
    %c0_i32_0 = arith.constant 0 : i32
    %c0_i32_1 = arith.constant 0 : i32
    return %arg0, %c0_i32, %c0_i32_0 : i32, i32, i32
  }
}

module attributes {stable_mosaic.version = 11 : i64} {
  func.func @kernel(%arg0: i32, %arg1: memref<16x32xbf16, #tpu.memory_space<vmem>>, %arg2: memref<1x16xi32, #tpu.memory_space<vmem>>, %arg3: memref<16x1xi32, #tpu.memory_space<vmem>>, %arg4: memref<1x1x1xf32, #tpu.memory_space<vmem>>) attributes {dimension_semantics = [#tpu.dimension_semantics<parallel>], iteration_bounds = array<i64: 1>, scalar_prefetch = 0 : i64, scratch_operands = 0 : i64, tpu.core_type = #tpu.core_type<tc>, window_params = [{pipeline_mode = #tpu.pipeline_mode<synchronous>, transform_indices = @transform_0, window_bounds = array<i64: 16, 32>}, {pipeline_mode = #tpu.pipeline_mode<synchronous>, transform_indices = @transform_1, window_bounds = array<i64: 1, 16>}, {pipeline_mode = #tpu.pipeline_mode<synchronous>, transform_indices = @transform_2, window_bounds = array<i64: 16, 1>}, {transform_indices = @transform_3, window_bounds = array<i64: 1, 1, 1>}]} {
    %c0 = arith.constant 0 : index
    %c0_0 = arith.constant 0 : index
    %0 = vector.load %arg1[%c0, %c0_0] : memref<16x32xbf16, #tpu.memory_space<vmem>>, vector<16x32xbf16>
    %c0_1 = arith.constant 0 : index
    %c0_2 = arith.constant 0 : index
    %1 = vector.load %arg3[%c0_1, %c0_2] : memref<16x1xi32, #tpu.memory_space<vmem>>, vector<16x1xi32>
    %2 = arith.extf %0 : vector<16x32xbf16> to vector<16x32xf32>
    %3 = arith.mulf %2, %2 : vector<16x32xf32>
    %cst = arith.constant dense<0.000000e+00> : vector<16xf32>
    %4 = vector.multi_reduction <add>, %3, %cst [1] : vector<16x32xf32> to vector<16xf32>
    %5 = vector.shape_cast %4 : vector<16xf32> to vector<16x1xf32>
    %cst_3 = arith.constant 14.2857141 : f32
    %6 = vector.broadcast %cst_3 : f32 to vector<16x1xf32>
    %7 = arith.mulf %5, %6 : vector<16x1xf32>
    %cst_4 = arith.constant 0.000000e+00 : f32
    %8 = vector.broadcast %cst_4 : f32 to vector<16x1xf32>
    %c0_5 = arith.constant 0 : index
    %c0_6 = arith.constant 0 : index
    %9 = vector.load %arg1[%c0_5, %c0_6] : memref<16x32xbf16, #tpu.memory_space<vmem>>, vector<16x32xbf16>
    %c0_7 = arith.constant 0 : index
    %c0_8 = arith.constant 0 : index
    %10 = vector.load %arg2[%c0_7, %c0_8] : memref<1x16xi32, #tpu.memory_space<vmem>>, vector<1x16xi32>
    %cst_9 = arith.constant dense<0.000000e+00> : vector<16x16xf32>
    %11 = tpu.matmul %0, %9, %cst_9 {dimension_numbers = #tpu.dot_dimension_numbers<[1], [1], [0], [0], [0, 0, 1, 0], [], []>} : vector<16x32xbf16>, vector<16x32xbf16>, vector<16x16xf32> -> vector<16x16xf32>
    %cst_10 = arith.constant 14.2857141 : f32
    %12 = vector.broadcast %cst_10 : f32 to vector<16x16xf32>
    %13 = arith.mulf %11, %12 : vector<16x16xf32>
    %cst_11 = arith.constant 14.2857141 : f32
    %14 = vector.broadcast %cst_11 : f32 to vector<16x16xf32>
    %15 = arith.subf %13, %14 : vector<16x16xf32>
    %16 = math.exp %15 : vector<16x16xf32>
    %17 = vector.broadcast %1 : vector<16x1xi32> to vector<16x16xi32>
    %18 = vector.broadcast %10 : vector<1x16xi32> to vector<16x16xi32>
    %19 = arith.cmpi eq, %17, %18 : vector<16x16xi32>
    %cst_12 = arith.constant dense<0.000000e+00> : vector<16xf32>
    %20 = vector.multi_reduction <add>, %16, %cst_12 [1] : vector<16x16xf32> to vector<16xf32>
    %21 = vector.shape_cast %20 : vector<16xf32> to vector<16x1xf32>
    %22 = arith.addf %8, %21 : vector<16x1xf32>
    %23 = arith.extui %19 : vector<16x16xi1> to vector<16x16xi32>
    %24 = arith.sitofp %23 : vector<16x16xi32> to vector<16x16xf32>
    %cst_13 = arith.constant dense<0.000000e+00> : vector<16xf32>
    %25 = vector.multi_reduction <add>, %24, %cst_13 [1] : vector<16x16xf32> to vector<16xf32>
    %26 = vector.shape_cast %25 : vector<16xf32> to vector<16x1xf32>
    %27 = arith.addf %8, %26 : vector<16x1xf32>
    %cst_14 = arith.constant 0.000000e+00 : f32
    %28 = vector.broadcast %cst_14 : f32 to vector<16x16xf32>
    %29 = arith.select %19, %13, %28 : vector<16x16xi1>, vector<16x16xf32>
    %cst_15 = arith.constant dense<0.000000e+00> : vector<16xf32>
    %30 = vector.multi_reduction <add>, %29, %cst_15 [1] : vector<16x16xf32> to vector<16xf32>
    %31 = vector.shape_cast %30 : vector<16xf32> to vector<16x1xf32>
    %32 = arith.addf %8, %31 : vector<16x1xf32>
    %cst_16 = arith.constant 14.2857141 : f32
    %33 = vector.broadcast %cst_16 : f32 to vector<16x1xf32>
    %34 = arith.subf %7, %33 : vector<16x1xf32>
    %35 = math.exp %34 : vector<16x1xf32>
    %36 = arith.subf %22, %35 : vector<16x1xf32>
    %cst_17 = arith.constant 1.000000e+00 : f32
    %37 = vector.broadcast %cst_17 : f32 to vector<16x1xf32>
    %38 = arith.subf %27, %37 : vector<16x1xf32>
    %39 = arith.subf %32, %7 : vector<16x1xf32>
    %40 = math.log %36 : vector<16x1xf32>
    %cst_18 = arith.constant 14.2857141 : f32
    %41 = vector.broadcast %cst_18 : f32 to vector<16x1xf32>
    %42 = arith.addf %40, %41 : vector<16x1xf32>
    %43 = arith.mulf %38, %42 : vector<16x1xf32>
    %44 = arith.subf %39, %43 : vector<16x1xf32>
    %45 = arith.divf %44, %38 : vector<16x1xf32>
    %46 = vector.shape_cast %45 : vector<16x1xf32> to vector<1x16x1xf32>
    %cst_19 = arith.constant dense<0.000000e+00> : vector<1xf32>
    %47 = vector.multi_reduction <add>, %46, %cst_19 [1, 2] : vector<1x16x1xf32> to vector<1xf32>
    %48 = vector.shape_cast %47 : vector<1xf32> to vector<1x1x1xf32>
    %49 = vector.extract %48[0, 0, 0] : f32 from vector<1x1x1xf32>
    %50 = vector.broadcast %49 : f32 to vector<1x1x1xf32>
    %c0_20 = arith.constant 0 : index
    %c0_21 = arith.constant 0 : index
    %c0_22 = arith.constant 0 : index
    %51 = vector.load %arg4[%c0_20, %c0_21, %c0_22] : memref<1x1x1xf32, #tpu.memory_space<vmem>>, vector<1x1x1xf32>
    tpu.vector_store %arg4[%c0_20, %c0_21, %c0_22], %50 {strides = array<i32>} : memref<1x1x1xf32, #tpu.memory_space<vmem>>, vector<1x1x1xf32>,
    return
  }
  func.func @transform_0(%arg0: i32) -> (i32, i32) {
    %c0_i32 = arith.constant 0 : i32
    %c0_i32_0 = arith.constant 0 : i32
    %c0_i32_1 = arith.constant 0 : i32
    return %c0_i32, %c0_i32_0 : i32, i32
  }
  func.func @transform_1(%arg0: i32) -> (i32, i32) {
    %c0_i32 = arith.constant 0 : i32
    %c0_i32_0 = arith.constant 0 : i32
    %c0_i32_1 = arith.constant 0 : i32
    return %c0_i32, %c0_i32_0 : i32, i32
  }
  func.func @transform_2(%arg0: i32) -> (i32, i32) {
    %c0_i32 = arith.constant 0 : i32
    %c0_i32_0 = arith.constant 0 : i32
    %c0_i32_1 = arith.constant 0 : i32
    return %c0_i32, %c0_i32_0 : i32, i32
  }
  func.func @transform_3(%arg0: i32) -> (i32, i32, i32) {
    %c0_i32 = arith.constant 0 : i32
    %c0_i32_0 = arith.constant 0 : i32
    %c0_i32_1 = arith.constant 0 : i32
    return %arg0, %c0_i32, %c0_i32_0 : i32, i32, i32
  }
}

</mosaic_0001>

<llo_original>
// kernel: tpu_custom_call.1
$region0: #{tpu_custom_call.1}
  #allocation0 [shape = 'u32[]', space=smem, size = 0x4, offset = 0x4, fixed_abs, tag = 'smem constant byte address 0x4 - core index']
  #allocation1 [shape = 'u32[144,128]{1,0:T(1,128)}', space=vmem, size = 0x12000, scoped, tag = 'internal scratch']
  %s0 = inlined_call_operand.vmem [shape: bf16[16,32], index: 0, kind: input, shape index: {}]
  %s1 = inlined_call_operand.vmem [shape: s32[1,16], index: 1, kind: input, shape index: {}]
  %s2 = inlined_call_operand.vmem [shape: s32[16,1], index: 2, kind: input, shape index: {}]
  %s3 = inlined_call_operand.hbm [shape: f32[1,1,1], index: 3, kind: output, shape index: {}]
  %s4 = sld [smem:[#allocation0]]
  $region22: #{tpu_custom_call.1} parent=0
    _
  %s6 = ssub.s32 1, %s4
  %s7 = scalar_select 0, %s6, %s4
  $region1: #{tpu_custom_call.1} parent=0
    #allocation2 [shape = 'u8[512]{0}', space=vmem, size = 0x400, scoped, tag = 'output window, operand 0, single buffered']
    #allocation3 [shape = 's32[1]{0}', space=sflag, size = 0x4, scoped, tag = 'scoped memory for tpu_custom_call.1']
    %8 = vsyncpa [#allocation3], 0
    // Predicated region
    $region2: #{tpu_custom_call.1} parent=1 // pred_check
      _
    $region3: #{tpu_custom_call.1} parent=1 // pred_check_branch
      %10 = sbr.rel (0) target = $region5
    $region4: #{tpu_custom_call.1} parent=1 // pred_region
      _
    $region5: #{tpu_custom_call.1} parent=1 // pred_fallthru
      _
    // Predicated region
    $region6: #{tpu_custom_call.1} parent=1 // pred_check
      _
    $region7: #{tpu_custom_call.1} parent=1 // pred_check_branch
      %12 = sbr.rel (0) target = $region9
    $region8: #{tpu_custom_call.1} parent=1 // pred_region
      _
    $region9: #{tpu_custom_call.1} parent=1 // pred_fallthru
      _
    // Predicated region
    $region10: #{tpu_custom_call.1} parent=1 // pred_check
      _
    $region11: #{tpu_custom_call.1} parent=1 // pred_check_branch
      %14 = sbr.rel (0) target = $region13
    $region12: #{tpu_custom_call.1} parent=1 // pred_region
      _
    $region13: #{tpu_custom_call.1} parent=1 // pred_fallthru
      _
    %v16 = vld [vmem:[%s0] sm:$0xf]
    %v17 = vld [vmem:[%s0 + $0x4] sm:$0xf]
    %v18 = vld [vmem:[%s2] sm:$0xff]
    %v19 = vld [vmem:[%s2 + $0x8] sm:$0xff]
    %v20 = vunpack.c.l.bf16 %v16
    %v21 = vunpack.c.l.bf16 %v17
    %v22 = vmul.f32 %v20, %v20
    %v23 = vmul.f32 %v21, %v21
    %vm24 = vcmask 261120
    %v25 = vsel %vm24, %v22, 0.0
    %26 = vadd.xlane.f32.xlu0 %v25
    %v27 = vpop.xlane.xlu0 %26
    %v28 = vsel %vm24, %v23, 0.0
    %29 = vadd.xlane.f32.xlu0 %v28
    %v30 = vpop.xlane.xlu0 %29
    %v31 = vmul.f32 %v27, 14.285714
    %v32 = vmul.f32 %v30, 14.285714
    %v33 = vld [vmem:[%s1] sm:$0x1]
    %v36 = vunpack.c.l.b16 %v16
    %v37 = vunpack.c.l.b16 %v17
    %v38 = vpack.c.b16 %v37, %v36
    %v40 = vsel %vm24, %v38, 0
    %42 = vmatprep.subr.bf16.mxu0 0
    %43 = vmatpush1.bf16.xpose.msra.mxu0 0
    %44 = vmatprep.subr.bf16.mxu0 0
    %45 = vmatpush1.bf16.xpose.msra.mxu0 0
    %46 = vmatprep.subr.bf16.mxu0 0
    %47 = vmatpush1.bf16.xpose.msra.mxu0 0
    %48 = vmatprep.subr.bf16.mxu0 0
    %49 = vmatpush1.bf16.xpose.msra.mxu0 0
    %50 = vmatprep.subr.bf16.mxu0 0
    %51 = vmatpush1.bf16.xpose.msra.mxu0 0
    %52 = vmatprep.subr.bf16.mxu0 0
    %53 = vmatpush1.bf16.xpose.msra.mxu0 0
    %54 = vmatprep.subr.bf16.mxu0 0
    %55 = vmatpush1.bf16.xpose.msra.mxu0 0
    %56 = vmatprep.subr.bf16.mxu0 0
    %57 = vmatpush1.bf16.xpose.msra.mxu0 %v40
    %58 = vmatprep.subr.bf16.mxu0 0
    %59 = vmatpush2.bf16.xpose.msra.mxu0 0
    %60 = vmatprep.subr.bf16.mxu0 0
    %61 = vmatpush2.bf16.xpose.msra.mxu0 0
    %62 = vmatprep.subr.bf16.mxu0 0
    %63 = vmatpush2.bf16.xpose.msra.mxu0 0
    %64 = vmatprep.subr.bf16.mxu0 0
    %65 = vmatpush2.bf16.xpose.msra.mxu0 0
    %66 = vmatprep.subr.bf16.mxu0 0
    %67 = vmatpush2.bf16.xpose.msra.mxu0 0
    %68 = vmatprep.subr.bf16.mxu0 0
    %69 = vmatpush2.bf16.xpose.msra.mxu0 0
    %70 = vmatprep.subr.bf16.mxu0 0
    %71 = vmatpush2.bf16.xpose.msra.mxu0 0
    %72 = vmatprep.subr.bf16.mxu0 0
    %73 = vmatpush2.bf16.xpose.msra.mxu0 0
    %74 = vmatprep.mubr.bf16.mxu0 0
    %75 = vmatmul.mubr.bf16.gmra.mxu0 %v40
    %v76 = vpop.f32.mrf.mxu0
    %v77 = vadd.f32 0.0, %v76
    %v78 = vpop.f32.mrf.mxu0
    %v79 = vpop.f32.mrf.mxu0
    %v80 = vadd.f32 0.0, %v79
    %v81 = vpop.f32.mrf.mxu0
    %82 = vdwg.mxu0
    %v83 = vmul.f32 %v77, 14.285714
    %v84 = vmul.f32 %v80, 14.285714
    %v85 = vsub.f32 %v83, 14.285714
    %v86 = vsub.f32 %v84, 14.285714
    %v87 = vmul.f32 %v85, 1.442695
    %v88 = vpow.pop %v87
    %v89 = vmul.f32 %v86, 1.442695
    %v90 = vpow.pop %v89
    %91 = vset.pattern.permute.xlu0 0
    %92 = vperm.xlu0 %91, %v18
    %v93 = vpop.permute.xlu0 %92
    %94 = vset.pattern.permute.xlu0 0
    %95 = vperm.xlu0 %94, %v19
    %v96 = vpop.permute.xlu0 %95
    %v97 = vlaneseq
    %v98 = vshrl.u32 %v97, 7
    %v99 = vsub.s32 0, %v98
    %v100 = vrot.slane %v33, %v99
    %vm101 = vcmp.eq.s32.totalorder %v93, %v100
    %vm102 = vcmp.eq.s32.totalorder %v96, %v100
    %vm103 = vcmask 130048
    %v104 = vsel %vm103, %v88, 0.0
    %105 = vadd.xlane.f32.xlu0 %v104
    %v106 = vpop.xlane.xlu0 %105
    %v107 = vsel %vm103, %v90, 0.0
    %108 = vadd.xlane.f32.xlu0 %v107
    %v109 = vpop.xlane.xlu0 %108
    %v110 = vadd.f32 %v106, 0.0
    %v111 = vadd.f32 %v109, 0.0
    %v112 = vsel %vm101, 1, 0
    %v113 = vsel %vm102, 1, 0
    %v114 = vcvt.s32.f32 %v112
    %v115 = vcvt.s32.f32 %v113
    %v116 = vsel %vm103, %v114, 0.0
    %117 = vadd.xlane.f32.xlu0 %v116
    %v118 = vpop.xlane.xlu0 %117
    %v119 = vsel %vm103, %v115, 0.0
    %120 = vadd.xlane.f32.xlu0 %v119
    %v121 = vpop.xlane.xlu0 %120
    %v122 = vadd.f32 %v118, 0.0
    %v123 = vadd.f32 %v121, 0.0
    %v124 = vsel %vm101, %v83, 0.0
    %v125 = vsel %vm102, %v84, 0.0
    %v126 = vsel %vm103, %v124, 0.0
    %127 = vadd.xlane.f32.xlu0 %v126
    %v128 = vpop.xlane.xlu0 %127
    %v129 = vsel %vm103, %v125, 0.0
    %130 = vadd.xlane.f32.xlu0 %v129
    %v131 = vpop.xlane.xlu0 %130
    %v132 = vadd.f32 %v128, 0.0
    %v133 = vadd.f32 %v131, 0.0
    %v134 = vsub.f32 %v31, 14.285714
    %v135 = vsub.f32 %v32, 14.285714
    %v136 = vmul.f32 %v134, 1.442695
    %v137 = vpow.pop %v136
    %v138 = vmul.f32 %v135, 1.442695
    %v139 = vpow.pop %v138
    %v140 = vsub.f32 %v110, %v137
    %v141 = vsub.f32 %v111, %v139
    %v142 = vsub.f32 %v122, 1.0
    %v143 = vsub.f32 %v123, 1.0
    %v144 = vsub.f32 %v132, %v31
    %v145 = vsub.f32 %v133, %v32
    %v146 = vlog2.pop %v140
    %v147 = vmul.f32 %v146, 0.6931472
    %v148 = vlog2.pop %v141
    %v149 = vmul.f32 %v148, 0.6931472
    %v150 = vadd.f32 %v147, 14.285714
    %v151 = vadd.f32 %v149, 14.285714
    %v152 = vmul.f32 %v142, %v150
    %v153 = vmul.f32 %v143, %v151
    %v154 = vsub.f32 %v144, %v152
    %v155 = vsub.f32 %v145, %v153
    %v156 = vrcp.pop %v142
    %v157 = vmul.f32 %v154, %v156
    %v158 = vrcp.pop %v143
    %v159 = vmul.f32 %v155, %v158
    %vm160 = vcmask 7168
    %v161 = vsel %vm160, %v157, 0.0
    %v162 = vsel %vm160, %v159, 0.0
    %v163 = vadd.f32 %v161, %v162
    %164 = vadd.xlane.f32.xlu0 %v163
    %v165 = vpop.xlane.xlu0 %164
    %v166 = vrot.slane %v165, 4
    %v167 = vadd.f32 %v165, %v166
    %v168 = vrot.slane %v167, 2
    %v169 = vadd.f32 %v167, %v168
    %v170 = vrot.slane %v169, 1
    %v171 = vadd.f32 %v169, %v170
    %s172 = vtos %v171
    %v173 = vstv %s172
    %vm174 = vcmask 0
    %175 = vst.msk [vmem:[#allocation2] sm:$0x1] %vm174, %v173
    // Predicated region
    $region14: #{tpu_custom_call.1} parent=1 // pred_check
      _
    $region15: #{tpu_custom_call.1} parent=1 // pred_check_branch
      %177 = sbr.rel (0) target = $region17
    $region16: #{tpu_custom_call.1} parent=1 // pred_region
      %s179 = ssub.s32 16, 16
      %180 = vsyncadd [#allocation3], %s179
      %s182 = sshll.u32 [#allocation2], 4
      %s183 = int_to_ptr.vmem [resolvable:$true] %s182
      %185 = dma.vmem_to_hbm [thread:$0]  %s183, 16, %s3, [#allocation3]
    $region17: #{tpu_custom_call.1} parent=1 // pred_fallthru
      _
    // Predicated region
    $region18: #{tpu_custom_call.1} parent=1 // pred_check
      _
    $region19: #{tpu_custom_call.1} parent=1 // pred_check_branch
      %187 = sbr.rel (0) target = $region21
    $region20: #{tpu_custom_call.1} parent=1 // pred_region
      %188 = dma.done [#allocation3], 16
    $region21: #{tpu_custom_call.1} parent=1 // pred_fallthru
      _
    %189 = vsyncpa [#allocation3], 1

// kernel: tpu_custom_call.1
$region0: #{tpu_custom_call.1}
  #allocation0 [shape = 'u32[]', space=smem, size = 0x4, offset = 0x4, fixed_abs, tag = 'smem constant byte address 0x4 - core index']
  #allocation1 [shape = 'u32[144,128]{1,0:T(1,128)}', space=vmem, size = 0x12000, scoped, tag = 'internal scratch']
  %s0 = inlined_call_operand.vmem [shape: bf16[16,32], index: 0, kind: input, shape index: {}]
  %s1 = inlined_call_operand.vmem [shape: s32[1,16], index: 1, kind: input, shape index: {}]
  %s2 = inlined_call_operand.vmem [shape: s32[16,1], index: 2, kind: input, shape index: {}]
  %s3 = inlined_call_operand.hbm [shape: f32[1,1,1], index: 3, kind: output, shape index: {}]
  %s4 = sld [smem:[#allocation0]]
  $region22: #{tpu_custom_call.1} parent=0
    _
  %s6 = ssub.s32 1, %s4
  %s7 = scalar_select 0, %s6, %s4
  $region1: #{tpu_custom_call.1} parent=0
    #allocation2 [shape = 'u8[512]{0}', space=vmem, size = 0x400, scoped, tag = 'output window, operand 0, single buffered']
    #allocation3 [shape = 's32[1]{0}', space=sflag, size = 0x4, scoped, tag = 'scoped memory for tpu_custom_call.1']
    %8 = vsyncpa [#allocation3], 0
    // Predicated region
    $region2: #{tpu_custom_call.1} parent=1 // pred_check
      _
    $region3: #{tpu_custom_call.1} parent=1 // pred_check_branch
      %10 = sbr.rel (0) target = $region5
    $region4: #{tpu_custom_call.1} parent=1 // pred_region
      _
    $region5: #{tpu_custom_call.1} parent=1 // pred_fallthru
      _
    // Predicated region
    $region6: #{tpu_custom_call.1} parent=1 // pred_check
      _
    $region7: #{tpu_custom_call.1} parent=1 // pred_check_branch
      %12 = sbr.rel (0) target = $region9
    $region8: #{tpu_custom_call.1} parent=1 // pred_region
      _
    $region9: #{tpu_custom_call.1} parent=1 // pred_fallthru
      _
    // Predicated region
    $region10: #{tpu_custom_call.1} parent=1 // pred_check
      _
    $region11: #{tpu_custom_call.1} parent=1 // pred_check_branch
      %14 = sbr.rel (0) target = $region13
    $region12: #{tpu_custom_call.1} parent=1 // pred_region
      _
    $region13: #{tpu_custom_call.1} parent=1 // pred_fallthru
      _
    %v16 = vld [vmem:[%s0] sm:$0xf]
    %v17 = vld [vmem:[%s0 + $0x4] sm:$0xf]
    %v18 = vld [vmem:[%s2] sm:$0xff]
    %v19 = vld [vmem:[%s2 + $0x8] sm:$0xff]
    %v20 = vunpack.c.l.bf16 %v16
    %v21 = vunpack.c.l.bf16 %v17
    %v22 = vmul.f32 %v20, %v20
    %v23 = vmul.f32 %v21, %v21
    %vm24 = vcmask 261120
    %v25 = vsel %vm24, %v22, 0.0
    %26 = vadd.xlane.f32.xlu0 %v25
    %v27 = vpop.xlane.xlu0 %26
    %v28 = vsel %vm24, %v23, 0.0
    %29 = vadd.xlane.f32.xlu0 %v28
    %v30 = vpop.xlane.xlu0 %29
    %v31 = vmul.f32 %v27, 14.285714
    %v32 = vmul.f32 %v30, 14.285714
    %v33 = vld [vmem:[%s1] sm:$0x1]
    %v36 = vunpack.c.l.b16 %v16
    %v37 = vunpack.c.l.b16 %v17
    %v38 = vpack.c.b16 %v37, %v36
    %v40 = vsel %vm24, %v38, 0
    %42 = vmatprep.subr.bf16.mxu0 0
    %43 = vmatpush1.bf16.xpose.msra.mxu0 0
    %44 = vmatprep.subr.bf16.mxu0 0
    %45 = vmatpush1.bf16.xpose.msra.mxu0 0
    %46 = vmatprep.subr.bf16.mxu0 0
    %47 = vmatpush1.bf16.xpose.msra.mxu0 0
    %48 = vmatprep.subr.bf16.mxu0 0
    %49 = vmatpush1.bf16.xpose.msra.mxu0 0
    %50 = vmatprep.subr.bf16.mxu0 0
    %51 = vmatpush1.bf16.xpose.msra.mxu0 0
    %52 = vmatprep.subr.bf16.mxu0 0
    %53 = vmatpush1.bf16.xpose.msra.mxu0 0
    %54 = vmatprep.subr.bf16.mxu0 0
    %55 = vmatpush1.bf16.xpose.msra.mxu0 0
    %56 = vmatprep.subr.bf16.mxu0 0
    %57 = vmatpush1.bf16.xpose.msra.mxu0 %v40
    %58 = vmatprep.subr.bf16.mxu0 0
    %59 = vmatpush2.bf16.xpose.msra.mxu0 0
    %60 = vmatprep.subr.bf16.mxu0 0
    %61 = vmatpush2.bf16.xpose.msra.mxu0 0
    %62 = vmatprep.subr.bf16.mxu0 0
    %63 = vmatpush2.bf16.xpose.msra.mxu0 0
    %64 = vmatprep.subr.bf16.mxu0 0
    %65 = vmatpush2.bf16.xpose.msra.mxu0 0
    %66 = vmatprep.subr.bf16.mxu0 0
    %67 = vmatpush2.bf16.xpose.msra.mxu0 0
    %68 = vmatprep.subr.bf16.mxu0 0
    %69 = vmatpush2.bf16.xpose.msra.mxu0 0
    %70 = vmatprep.subr.bf16.mxu0 0
    %71 = vmatpush2.bf16.xpose.msra.mxu0 0
    %72 = vmatprep.subr.bf16.mxu0 0
    %73 = vmatpush2.bf16.xpose.msra.mxu0 0
    %74 = vmatprep.mubr.bf16.mxu0 0
    %75 = vmatmul.mubr.bf16.gmra.mxu0 %v40
    %v76 = vpop.f32.mrf.mxu0
    %v77 = vadd.f32 0.0, %v76
    %v78 = vpop.f32.mrf.mxu0
    %v79 = vpop.f32.mrf.mxu0
    %v80 = vadd.f32 0.0, %v79
    %v81 = vpop.f32.mrf.mxu0
    %82 = vdwg.mxu0
    %v83 = vmul.f32 %v77, 14.285714
    %v84 = vmul.f32 %v80, 14.285714
    %v85 = vsub.f32 %v83, 14.285714
    %v86 = vsub.f32 %v84, 14.285714
    %v87 = vmul.f32 %v85, 1.442695
    %v88 = vpow.pop %v87
    %v89 = vmul.f32 %v86, 1.442695
    %v90 = vpow.pop %v89
    %91 = vset.pattern.permute.xlu0 0
    %92 = vperm.xlu0 %91, %v18
    %v93 = vpop.permute.xlu0 %92
    %94 = vset.pattern.permute.xlu0 0
    %95 = vperm.xlu0 %94, %v19
    %v96 = vpop.permute.xlu0 %95
    %v97 = vlaneseq
    %v98 = vshrl.u32 %v97, 7
    %v99 = vsub.s32 0, %v98
    %v100 = vrot.slane %v33, %v99
    %vm101 = vcmp.eq.s32.totalorder %v93, %v100
    %vm102 = vcmp.eq.s32.totalorder %v96, %v100
    %vm103 = vcmask 130048
    %v104 = vsel %vm103, %v88, 0.0
    %105 = vadd.xlane.f32.xlu0 %v104
    %v106 = vpop.xlane.xlu0 %105
    %v107 = vsel %vm103, %v90, 0.0
    %108 = vadd.xlane.f32.xlu0 %v107
    %v109 = vpop.xlane.xlu0 %108
    %v110 = vadd.f32 %v106, 0.0
    %v111 = vadd.f32 %v109, 0.0
    %v112 = vsel %vm101, 1, 0
    %v113 = vsel %vm102, 1, 0
    %v114 = vcvt.s32.f32 %v112
    %v115 = vcvt.s32.f32 %v113
    %v116 = vsel %vm103, %v114, 0.0
    %117 = vadd.xlane.f32.xlu0 %v116
    %v118 = vpop.xlane.xlu0 %117
    %v119 = vsel %vm103, %v115, 0.0
    %120 = vadd.xlane.f32.xlu0 %v119
    %v121 = vpop.xlane.xlu0 %120
    %v122 = vadd.f32 %v118, 0.0
    %v123 = vadd.f32 %v121, 0.0
    %v124 = vsel %vm101, %v83, 0.0
    %v125 = vsel %vm102, %v84, 0.0
    %v126 = vsel %vm103, %v124, 0.0
    %127 = vadd.xlane.f32.xlu0 %v126
    %v128 = vpop.xlane.xlu0 %127
    %v129 = vsel %vm103, %v125, 0.0
    %130 = vadd.xlane.f32.xlu0 %v129
    %v131 = vpop.xlane.xlu0 %130
    %v132 = vadd.f32 %v128, 0.0
    %v133 = vadd.f32 %v131, 0.0
    %v134 = vsub.f32 %v31, 14.285714
    %v135 = vsub.f32 %v32, 14.285714
    %v136 = vmul.f32 %v134, 1.442695
    %v137 = vpow.pop %v136
    %v138 = vmul.f32 %v135, 1.442695
    %v139 = vpow.pop %v138
    %v140 = vsub.f32 %v110, %v137
    %v141 = vsub.f32 %v111, %v139
    %v142 = vsub.f32 %v122, 1.0
    %v143 = vsub.f32 %v123, 1.0
    %v144 = vsub.f32 %v132, %v31
    %v145 = vsub.f32 %v133, %v32
    %v146 = vlog2.pop %v140
    %v147 = vmul.f32 %v146, 0.6931472
    %v148 = vlog2.pop %v141
    %v149 = vmul.f32 %v148, 0.6931472
    %v150 = vadd.f32 %v147, 14.285714
    %v151 = vadd.f32 %v149, 14.285714
    %v152 = vmul.f32 %v142, %v150
    %v153 = vmul.f32 %v143, %v151
    %v154 = vsub.f32 %v144, %v152
    %v155 = vsub.f32 %v145, %v153
    %v156 = vrcp.pop %v142
    %v157 = vmul.f32 %v154, %v156
    %v158 = vrcp.pop %v143
    %v159 = vmul.f32 %v155, %v158
    %vm160 = vcmask 7168
    %v161 = vsel %vm160, %v157, 0.0
    %v162 = vsel %vm160, %v159, 0.0
    %v163 = vadd.f32 %v161, %v162
    %164 = vadd.xlane.f32.xlu0 %v163
    %v165 = vpop.xlane.xlu0 %164
    %v166 = vrot.slane %v165, 4
    %v167 = vadd.f32 %v165, %v166
    %v168 = vrot.slane %v167, 2
    %v169 = vadd.f32 %v167, %v168
    %v170 = vrot.slane %v169, 1
    %v171 = vadd.f32 %v169, %v170
    %s172 = vtos %v171
    %v173 = vstv %s172
    %vm174 = vcmask 0
    %175 = vst.msk [vmem:[#allocation2] sm:$0x1] %vm174, %v173
    // Predicated region
    $region14: #{tpu_custom_call.1} parent=1 // pred_check
      _
    $region15: #{tpu_custom_call.1} parent=1 // pred_check_branch
      %177 = sbr.rel (0) target = $region17
    $region16: #{tpu_custom_call.1} parent=1 // pred_region
      %s179 = ssub.s32 16, 16
      %180 = vsyncadd [#allocation3], %s179
      %s182 = sshll.u32 [#allocation2], 4
      %s183 = int_to_ptr.vmem [resolvable:$true] %s182
      %185 = dma.vmem_to_hbm [thread:$0]  %s183, 16, %s3, [#allocation3]
    $region17: #{tpu_custom_call.1} parent=1 // pred_fallthru
      _
    // Predicated region
    $region18: #{tpu_custom_call.1} parent=1 // pred_check
      _
    $region19: #{tpu_custom_call.1} parent=1 // pred_check_branch
      %187 = sbr.rel (0) target = $region21
    $region20: #{tpu_custom_call.1} parent=1 // pred_region
      %188 = dma.done [#allocation3], 16
    $region21: #{tpu_custom_call.1} parent=1 // pred_fallthru
      _
    %189 = vsyncpa [#allocation3], 1

</llo_original>
